<compile_context>
chip_gen: v6e
topology: v6e:2x2x1
jax: 0.10.0
libtpu: 0.0.40
codegen_flags: <defaults>
</compile_context>

<pallas_src>
import functools

import jax
import jax.numpy as jnp
from jax.experimental import pallas as pl
from jax.experimental.pallas import tpu as pltpu

HIDDEN = 256


def _round_up(x, m):
    return ((x + m - 1) // m) * m


def _actor_kernel(x_ref, w1_ref, b1_ref, w2_ref, b2_ref, w3_ref, b3_ref,
                  w4_ref, b4_ref, o_ref, *, rows_per_block, compute_dtype):
    # Layer 1: single fused K=16 dot (concat done in the wrapper).
    x = x_ref[...].astype(compute_dtype)
    h = jnp.dot(x, w1_ref[...], preferred_element_type=jnp.float32) + b1_ref[...]
    h = jnp.maximum(h, 0.0)                                           # ReLU (f32)
    # Layers 2 & 3: 256x256 MXU matmuls, f32 accumulation.
    h = jnp.maximum(
        jnp.dot(h.astype(compute_dtype), w2_ref[...],
                preferred_element_type=jnp.float32) + b2_ref[...], 0.0)
    h = jnp.maximum(
        jnp.dot(h.astype(compute_dtype), w3_ref[...],
                preferred_element_type=jnp.float32) + b3_ref[...], 0.0)
    # Final layer (K=256, N=1): VPU elementwise mul + XLU lane-reduce instead
    # of an N=1 MXU matmul.  The reduce result is produced directly in a
    # lane-dense (rows_per_block, 128) layout for an unmasked store.
    hw = h * w4_ref[...]                                              # (tb, 256)
    out = jnp.sum(hw.reshape(rows_per_block, 128, HIDDEN), axis=-1)   # (R, 128)
    out = out + b4_ref[...]                                           # + scalar bias
    o_ref[...] = out[None].astype(o_ref.dtype)                        # (1, R, 128)


@functools.partial(jax.jit, static_argnames=("block_b", "use_bf16"))
def actor_forward(state, env_emb, params, block_b=1024, use_bf16=False):
    """Pallas equivalent of Actor.forward(state, env_emb) -> (B, 1)."""
    B, state_dim = state.shape
    emb_dim = env_emb.shape[1]
    D = state_dim + emb_dim
    w1, b1, w2, b2, w3, b3, w4, b4 = params
    assert w1.shape[0] == D, "W1 rows must follow concat([state, env_emb]) order"

    compute_dtype = jnp.bfloat16 if use_bf16 else jnp.float32
    if use_bf16:
        w1, w2, w3 = (w.astype(jnp.bfloat16) for w in (w1, w2, w3))
    w4_row = w4.reshape(1, HIDDEN).astype(jnp.float32)   # lane-dense row for the reduce

    # ---- tile / grid selection (balanced tiles, multiple of 128 rows) ----
    G = max(1, -(-B // block_b))          # cdiv(B, block_b)
    if B >= 512:
        G = max(G, 2)                     # v7x: shard "parallel" axis over both TCs
    tb = _round_up(-(-B // G), 128)       # rows per tile, multiple of 128
    B_pad = G * tb
    R = tb // 128                         # lane-dense output rows per tile

    # Tiny (B, D) concat built once in the wrapper (removes a second MXU pass).
    x = jnp.concatenate([state, env_emb], axis=-1)
    pad = B_pad - B
    if pad:
        x = jnp.pad(x, ((0, pad), (0, 0)))

    # Weights/biases are grid-invariant; constant index_map keeps them in VMEM.
    const = lambda shape: pl.BlockSpec(shape, lambda i: (0, 0))

    flops = 2 * B_pad * (D * HIDDEN + 2 * HIDDEN * HIDDEN + HIDDEN)
    bytes_accessed = 4 * (B_pad * (D + 1) + sum(int(p.size) for p in params))

    kernel = functools.partial(_actor_kernel,
                               rows_per_block=R,
                               compute_dtype=compute_dtype)

    out = pl.pallas_call(
        kernel,
        out_shape=jax.ShapeDtypeStruct((G, R, 128), jnp.float32),
        grid_spec=pltpu.PrefetchScalarGridSpec(
            num_scalar_prefetch=0,
            grid=(G,),
            in_specs=[
                pl.BlockSpec((tb, D), lambda i: (i, 0)),    # fused input tile
                const((D, HIDDEN)),                         # W1 (single K=16 dot)
                const((1, HIDDEN)),                         # b1
                const((HIDDEN, HIDDEN)),                    # W2
                const((1, HIDDEN)),                         # b2
                const((HIDDEN, HIDDEN)),                    # W3
                const((1, HIDDEN)),                         # b3
                const((1, HIDDEN)),                         # W4 (as row)
                const((1, 1)),                              # b4
            ],
            out_specs=pl.BlockSpec((1, R, 128), lambda i: (i, 0, 0)),
        ),
        compiler_params=pltpu.CompilerParams(
            dimension_semantics=("parallel",)),
        cost_estimate=pl.CostEstimate(
            flops=flops, transcendentals=0, bytes_accessed=bytes_accessed),
    )(x, w1, b1, w2, b2, w3, b3, w4_row, b4)

    # Lane-dense (G, R, 128) -> (B, 1); pad rows sliced off.
    return out.reshape(-1)[:B].reshape(B, 1)


def init_actor_params(key, state_dim):
    """Deterministic init mimicking torch.nn.Linear default U(-1/sqrt(fan_in), +)."""
    input_dim = state_dim + 3
    dims = [(input_dim, HIDDEN), (HIDDEN, HIDDEN), (HIDDEN, HIDDEN), (HIDDEN, 1)]
    params = []
    for (fan_in, fan_out) in dims:
        key, kw, kb = jax.random.split(key, 3)
        bound = 1.0 / jnp.sqrt(jnp.float32(fan_in))
        w = jax.random.uniform(kw, (fan_in, fan_out), jnp.float32, -bound, bound)
        b = jax.random.uniform(kb, (1, fan_out), jnp.float32, -bound, bound)
        params.extend([w, b])
    return tuple(params)


def actor_forward_ref(state, env_emb, params):
    """Plain-JAX reference (full-precision matmuls) for validation."""
    hp = jax.lax.Precision.HIGHEST
    x = jnp.concatenate([state, env_emb], axis=-1)
    w1, b1, w2, b2, w3, b3, w4, b4 = params
    h = jnp.maximum(jnp.dot(x, w1, precision=hp) + b1, 0.0)
    h = jnp.maximum(jnp.dot(h, w2, precision=hp) + b2, 0.0)
    h = jnp.maximum(jnp.dot(h, w3, precision=hp) + b3, 0.0)
    return jnp.dot(h, w4, precision=hp) + b4


if __name__ == "__main__":
    key = jax.random.PRNGKey(0)
    state_dim = 13                        # input_dim = state_dim + 3 = 16

    k_params, k_state, k_emb = jax.random.split(key, 3)
    params = init_actor_params(k_params, state_dim)

    # Case 1: small batch; tile rounds up to one 128-row block.
    batch = 16
    state = jax.random.normal(k_state, (batch, state_dim), jnp.float32)
    env_emb = jax.random.normal(k_emb, (batch, 3), jnp.float32)
    out = jax.block_until_ready(actor_forward(state, env_emb, params))
    ref = actor_forward_ref(state, env_emb, params)
    assert out.shape == (batch, 1)
    assert jnp.allclose(out, ref, atol=1e-3, rtol=1e-3), "mismatch vs reference (B=16, f32)"

    # Case 2: batch not divisible by 8 -> exercises the padding path.
    batch2 = 20
    k_state2, k_emb2 = jax.random.split(k_state)
    state2 = jax.random.normal(k_state2, (batch2, state_dim), jnp.float32)
    env_emb2 = jax.random.normal(k_emb2, (batch2, 3), jnp.float32)
    out2 = jax.block_until_ready(actor_forward(state2, env_emb2, params))
    ref2 = actor_forward_ref(state2, env_emb2, params)
    assert out2.shape == (batch2, 1)
    assert jnp.allclose(out2, ref2, atol=1e-3, rtol=1e-3), "mismatch vs reference (B=20, f32)"

    # Case 3: bf16 matmul path (f32 accumulation) -> looser tolerance.
    out_bf = jax.block_until_ready(actor_forward(state, env_emb, params, use_bf16=True))
    assert out_bf.shape == (batch, 1)
    assert jnp.allclose(out_bf, ref, atol=5e-2, rtol=5e-2), "mismatch vs reference (bf16)"

    print("KERNEL_OK")
</pallas_src>

<mosaic_0001>
module attributes {stable_mosaic.version = 11 : i64} {
  func.func @_actor_kernel(%arg0: i32, %arg1: memref<128x16xf32, #tpu.memory_space<vmem>>, %arg2: memref<16x256xf32, #tpu.memory_space<vmem>>, %arg3: memref<1x256xf32, #tpu.memory_space<vmem>>, %arg4: memref<256x256xf32, #tpu.memory_space<vmem>>, %arg5: memref<1x256xf32, #tpu.memory_space<vmem>>, %arg6: memref<256x256xf32, #tpu.memory_space<vmem>>, %arg7: memref<1x256xf32, #tpu.memory_space<vmem>>, %arg8: memref<1x256xf32, #tpu.memory_space<vmem>>, %arg9: memref<1x1xf32, #tpu.memory_space<vmem>>, %arg10: memref<1x1x128xf32, #tpu.memory_space<vmem>>) attributes {dimension_semantics = [#tpu.dimension_semantics<parallel>], iteration_bounds = array<i64: 1>, scalar_prefetch = 0 : i64, scratch_operands = 0 : i64, tpu.core_type = #tpu.core_type<tc>, window_params = [{transform_indices = @transform_0, window_bounds = array<i64: 128, 16>}, {pipeline_mode = #tpu.pipeline_mode<synchronous>, transform_indices = @transform_1, window_bounds = array<i64: 16, 256>}, {pipeline_mode = #tpu.pipeline_mode<synchronous>, transform_indices = @transform_2, window_bounds = array<i64: 1, 256>}, {pipeline_mode = #tpu.pipeline_mode<synchronous>, transform_indices = @transform_3, window_bounds = array<i64: 256, 256>}, {pipeline_mode = #tpu.pipeline_mode<synchronous>, transform_indices = @transform_4, window_bounds = array<i64: 1, 256>}, {pipeline_mode = #tpu.pipeline_mode<synchronous>, transform_indices = @transform_5, window_bounds = array<i64: 256, 256>}, {pipeline_mode = #tpu.pipeline_mode<synchronous>, transform_indices = @transform_6, window_bounds = array<i64: 1, 256>}, {pipeline_mode = #tpu.pipeline_mode<synchronous>, transform_indices = @transform_7, window_bounds = array<i64: 1, 256>}, {pipeline_mode = #tpu.pipeline_mode<synchronous>, transform_indices = @transform_8, window_bounds = array<i64: 1, 1>}, {transform_indices = @transform_9, window_bounds = array<i64: 1, 1, 128>}]} {
    %c0 = arith.constant 0 : index
    %c0_0 = arith.constant 0 : index
    %0 = vector.load %arg1[%c0, %c0_0] : memref<128x16xf32, #tpu.memory_space<vmem>>, vector<128x16xf32>
    %c0_1 = arith.constant 0 : index
    %c0_2 = arith.constant 0 : index
    %1 = vector.load %arg2[%c0_1, %c0_2] : memref<16x256xf32, #tpu.memory_space<vmem>>, vector<16x256xf32>
    %cst = arith.constant dense<0.000000e+00> : vector<128x256xf32>
    %2 = tpu.matmul %0, %1, %cst {dimension_numbers = #tpu.dot_dimension_numbers<[1], [0], [0], [1], [0, 0, 1, 1], [], []>} : vector<128x16xf32>, vector<16x256xf32>, vector<128x256xf32> -> vector<128x256xf32>
    %c0_3 = arith.constant 0 : index
    %c0_4 = arith.constant 0 : index
    %3 = vector.load %arg3[%c0_3, %c0_4] : memref<1x256xf32, #tpu.memory_space<vmem>>, vector<1x256xf32>
    %4 = vector.broadcast %3 : vector<1x256xf32> to vector<128x256xf32>
    %5 = arith.addf %2, %4 : vector<128x256xf32>
    %cst_5 = arith.constant 0.000000e+00 : f32
    %6 = vector.broadcast %cst_5 : f32 to vector<128x256xf32>
    %7 = arith.maximumf %5, %6 : vector<128x256xf32>
    %c0_6 = arith.constant 0 : index
    %c0_7 = arith.constant 0 : index
    %8 = vector.load %arg4[%c0_6, %c0_7] : memref<256x256xf32, #tpu.memory_space<vmem>>, vector<256x256xf32>
    %cst_8 = arith.constant dense<0.000000e+00> : vector<128x256xf32>
    %9 = tpu.matmul %7, %8, %cst_8 {dimension_numbers = #tpu.dot_dimension_numbers<[1], [0], [0], [1], [0, 0, 1, 1], [], []>} : vector<128x256xf32>, vector<256x256xf32>, vector<128x256xf32> -> vector<128x256xf32>
    %c0_9 = arith.constant 0 : index
    %c0_10 = arith.constant 0 : index
    %10 = vector.load %arg5[%c0_9, %c0_10] : memref<1x256xf32, #tpu.memory_space<vmem>>, vector<1x256xf32>
    %11 = vector.broadcast %10 : vector<1x256xf32> to vector<128x256xf32>
    %12 = arith.addf %9, %11 : vector<128x256xf32>
    %cst_11 = arith.constant 0.000000e+00 : f32
    %13 = vector.broadcast %cst_11 : f32 to vector<128x256xf32>
    %14 = arith.maximumf %12, %13 : vector<128x256xf32>
    %c0_12 = arith.constant 0 : index
    %c0_13 = arith.constant 0 : index
    %15 = vector.load %arg6[%c0_12, %c0_13] : memref<256x256xf32, #tpu.memory_space<vmem>>, vector<256x256xf32>
    %cst_14 = arith.constant dense<0.000000e+00> : vector<128x256xf32>
    %16 = tpu.matmul %14, %15, %cst_14 {dimension_numbers = #tpu.dot_dimension_numbers<[1], [0], [0], [1], [0, 0, 1, 1], [], []>} : vector<128x256xf32>, vector<256x256xf32>, vector<128x256xf32> -> vector<128x256xf32>
    %c0_15 = arith.constant 0 : index
    %c0_16 = arith.constant 0 : index
    %17 = vector.load %arg7[%c0_15, %c0_16] : memref<1x256xf32, #tpu.memory_space<vmem>>, vector<1x256xf32>
    %18 = vector.broadcast %17 : vector<1x256xf32> to vector<128x256xf32>
    %19 = arith.addf %16, %18 : vector<128x256xf32>
    %cst_17 = arith.constant 0.000000e+00 : f32
    %20 = vector.broadcast %cst_17 : f32 to vector<128x256xf32>
    %21 = arith.maximumf %19, %20 : vector<128x256xf32>
    %c0_18 = arith.constant 0 : index
    %c0_19 = arith.constant 0 : index
    %22 = vector.load %arg8[%c0_18, %c0_19] : memref<1x256xf32, #tpu.memory_space<vmem>>, vector<1x256xf32>
    %23 = vector.broadcast %22 : vector<1x256xf32> to vector<128x256xf32>
    %24 = arith.mulf %21, %23 : vector<128x256xf32>
    %25 = vector.shape_cast %24 : vector<128x256xf32> to vector<1x128x256xf32>
    %cst_20 = arith.constant dense<0.000000e+00> : vector<1x128xf32>
    %26 = vector.multi_reduction <add>, %25, %cst_20 [2] : vector<1x128x256xf32> to vector<1x128xf32>
    %c0_21 = arith.constant 0 : index
    %c0_22 = arith.constant 0 : index
    %27 = vector.load %arg9[%c0_21, %c0_22] : memref<1x1xf32, #tpu.memory_space<vmem>>, vector<1x1xf32>
    %28 = vector.broadcast %27 : vector<1x1xf32> to vector<1x128xf32>
    %29 = arith.addf %26, %28 : vector<1x128xf32>
    %30 = vector.shape_cast %29 : vector<1x128xf32> to vector<1x1x128xf32>
    %c0_23 = arith.constant 0 : index
    %c0_24 = arith.constant 0 : index
    %c0_25 = arith.constant 0 : index
    %31 = vector.load %arg10[%c0_23, %c0_24, %c0_25] : memref<1x1x128xf32, #tpu.memory_space<vmem>>, vector<1x1x128xf32>
    tpu.vector_store %arg10[%c0_23, %c0_24, %c0_25], %30 {strides = array<i32>} : memref<1x1x128xf32, #tpu.memory_space<vmem>>, vector<1x1x128xf32>,
    return
  }
  func.func @transform_0(%arg0: i32) -> (i32, i32) {
    %c0_i32 = arith.constant 0 : i32
    %c0_i32_0 = arith.constant 0 : i32
    return %arg0, %c0_i32 : i32, i32
  }
  func.func @transform_1(%arg0: i32) -> (i32, i32) {
    %c0_i32 = arith.constant 0 : i32
    %c0_i32_0 = arith.constant 0 : i32
    %c0_i32_1 = arith.constant 0 : i32
    return %c0_i32, %c0_i32_0 : i32, i32
  }
  func.func @transform_2(%arg0: i32) -> (i32, i32) {
    %c0_i32 = arith.constant 0 : i32
    %c0_i32_0 = arith.constant 0 : i32
    %c0_i32_1 = arith.constant 0 : i32
    return %c0_i32, %c0_i32_0 : i32, i32
  }
  func.func @transform_3(%arg0: i32) -> (i32, i32) {
    %c0_i32 = arith.constant 0 : i32
    %c0_i32_0 = arith.constant 0 : i32
    %c0_i32_1 = arith.constant 0 : i32
    return %c0_i32, %c0_i32_0 : i32, i32
  }
  func.func @transform_4(%arg0: i32) -> (i32, i32) {
    %c0_i32 = arith.constant 0 : i32
    %c0_i32_0 = arith.constant 0 : i32
    %c0_i32_1 = arith.constant 0 : i32
    return %c0_i32, %c0_i32_0 : i32, i32
  }
  func.func @transform_5(%arg0: i32) -> (i32, i32) {
    %c0_i32 = arith.constant 0 : i32
    %c0_i32_0 = arith.constant 0 : i32
    %c0_i32_1 = arith.constant 0 : i32
    return %c0_i32, %c0_i32_0 : i32, i32
  }
  func.func @transform_6(%arg0: i32) -> (i32, i32) {
    %c0_i32 = arith.constant 0 : i32
    %c0_i32_0 = arith.constant 0 : i32
    %c0_i32_1 = arith.constant 0 : i32
    return %c0_i32, %c0_i32_0 : i32, i32
  }
  func.func @transform_7(%arg0: i32) -> (i32, i32) {
    %c0_i32 = arith.constant 0 : i32
    %c0_i32_0 = arith.constant 0 : i32
    %c0_i32_1 = arith.constant 0 : i32
    return %c0_i32, %c0_i32_0 : i32, i32
  }
  func.func @transform_8(%arg0: i32) -> (i32, i32) {
    %c0_i32 = arith.constant 0 : i32
    %c0_i32_0 = arith.constant 0 : i32
    %c0_i32_1 = arith.constant 0 : i32
    return %c0_i32, %c0_i32_0 : i32, i32
  }
  func.func @transform_9(%arg0: i32) -> (i32, i32, i32) {
    %c0_i32 = arith.constant 0 : i32
    %c0_i32_0 = arith.constant 0 : i32
    %c0_i32_1 = arith.constant 0 : i32
    return %arg0, %c0_i32, %c0_i32_0 : i32, i32, i32
  }
}

</mosaic_0001>

<llo_original>
// kernel: actor_forward.1
$region0: #{actor_forward.1}
  #allocation0 [shape = 'u32[]', space=smem, size = 0x4, offset = 0x4, fixed_abs, tag = 'smem constant byte address 0x4 - core index']
  #allocation1 [shape = 'u32[144,128]{1,0:T(1,128)}', space=vmem, size = 0x12000, scoped, tag = 'internal scratch']
  #allocation2 [shape = 'f32[1,1]{1,0:T(1,128)S(1)}', space=vmem, size = 0x200, scoped, tag = 'scoped memory for actor_forward.1']
  %s0 = inlined_call_operand.vmem [shape: f32[128,16], index: 0, kind: input, shape index: {}]
  %s1 = inlined_call_operand.vmem [shape: f32[16,256], index: 1, kind: input, shape index: {}]
  %s2 = inlined_call_operand.vmem [shape: f32[1,256], index: 2, kind: input, shape index: {}]
  %s3 = inlined_call_operand.hbm [shape: f32[256,256], index: 3, kind: input, shape index: {}]
  %s4 = inlined_call_operand.vmem [shape: f32[1,256], index: 4, kind: input, shape index: {}]
  %s5 = inlined_call_operand.hbm [shape: f32[256,256], index: 5, kind: input, shape index: {}]
  %s6 = inlined_call_operand.vmem [shape: f32[1,256], index: 6, kind: input, shape index: {}]
  %s7 = inlined_call_operand.vmem [shape: f32[1,256], index: 7, kind: input, shape index: {}]
  %s8 = inlined_call_operand.<no memory space> [shape: f32[1,1], index: 8, kind: input, shape index: {}]
  %s9 = inlined_call_operand.vmem [shape: f32[1,1,128], index: 9, kind: output, shape index: {}]
  %s10 = sld [smem:[#allocation0]]
  $region54: #{actor_forward.1} parent=0
    _
  %s12 = ssub.s32 1, %s10
  %s13 = scalar_select 0, %s12, %s10
  %v14 = vstv %s8
  %15 = vst [vmem:[#allocation2] sm:$0x1] %v14
  $region1: #{actor_forward.1} parent=0
    #allocation3 [shape = 'u8[262144]{0}', space=vmem, size = 0x40000, scoped, tag = 'input window, operand 3, single buffered']
    #allocation4 [shape = 's32[1]{0}', space=sflag, size = 0x4, scoped, tag = 'scoped memory for actor_forward.1']
    #allocation5 [shape = 'u8[262144]{0}', space=vmem, size = 0x40000, scoped, tag = 'input window, operand 5, single buffered']
    #allocation6 [shape = 's32[1]{0}', space=sflag, size = 0x4, scoped, tag = 'scoped memory for actor_forward.1']
    %16 = vsyncpa [#allocation4], 0
    %17 = vsyncpa [#allocation6], 0
    // Predicated region
    $region2: #{actor_forward.1} parent=1 // pred_check
      _
    $region3: #{actor_forward.1} parent=1 // pred_check_branch
      %19 = sbr.rel (0) target = $region5
    $region4: #{actor_forward.1} parent=1 // pred_region
      _
    $region5: #{actor_forward.1} parent=1 // pred_fallthru
      _
    // Predicated region
    $region6: #{actor_forward.1} parent=1 // pred_check
      _
    $region7: #{actor_forward.1} parent=1 // pred_check_branch
      %21 = sbr.rel (0) target = $region9
    $region8: #{actor_forward.1} parent=1 // pred_region
      _
    $region9: #{actor_forward.1} parent=1 // pred_fallthru
      _
    // Predicated region
    $region10: #{actor_forward.1} parent=1 // pred_check
      _
    $region11: #{actor_forward.1} parent=1 // pred_check_branch
      %23 = sbr.rel (0) target = $region13
    $region12: #{actor_forward.1} parent=1 // pred_region
      _
    $region13: #{actor_forward.1} parent=1 // pred_fallthru
      _
    // Predicated region
    $region14: #{actor_forward.1} parent=1 // pred_check
      _
    $region15: #{actor_forward.1} parent=1 // pred_check_branch
      %25 = sbr.rel (0) target = $region17
    $region16: #{actor_forward.1} parent=1 // pred_region
      %s27 = ssub.s32 8192, 8192
      %28 = vsyncadd [#allocation4], %s27
      %s29 = sshll.u32 [#allocation3], 4
      %s30 = int_to_ptr.vmem [resolvable:$true] %s29
      %35 = dma.hbm_to_vmem [thread:$0]  %s3, 8192, %s30, [#allocation4], 256, 256, 16
    $region17: #{actor_forward.1} parent=1 // pred_fallthru
      _
    // Predicated region
    $region18: #{actor_forward.1} parent=1 // pred_check
      _
    $region19: #{actor_forward.1} parent=1 // pred_check_branch
      %37 = sbr.rel (0) target = $region21
    $region20: #{actor_forward.1} parent=1 // pred_region
      _
    $region21: #{actor_forward.1} parent=1 // pred_fallthru
      _
    // Predicated region
    $region22: #{actor_forward.1} parent=1 // pred_check
      _
    $region23: #{actor_forward.1} parent=1 // pred_check_branch
      %39 = sbr.rel (0) target = $region25
    $region24: #{actor_forward.1} parent=1 // pred_region
      %s41 = ssub.s32 8192, 8192
      %42 = vsyncadd [#allocation6], %s41
      %s43 = sshll.u32 [#allocation5], 4
      %s44 = int_to_ptr.vmem [resolvable:$true] %s43
      %49 = dma.hbm_to_vmem [thread:$0]  %s5, 8192, %s44, [#allocation6], 256, 256, 16
    $region25: #{actor_forward.1} parent=1 // pred_fallthru
      _
    // Predicated region
    $region26: #{actor_forward.1} parent=1 // pred_check
      _
    $region27: #{actor_forward.1} parent=1 // pred_check_branch
      %51 = sbr.rel (0) target = $region29
    $region28: #{actor_forward.1} parent=1 // pred_region
      _
    $region29: #{actor_forward.1} parent=1 // pred_fallthru
      _
    // Predicated region
    $region30: #{actor_forward.1} parent=1 // pred_check
      _
    $region31: #{actor_forward.1} parent=1 // pred_check_branch
      %53 = sbr.rel (0) target = $region33
    $region32: #{actor_forward.1} parent=1 // pred_region
      _
    $region33: #{actor_forward.1} parent=1 // pred_fallthru
      _
    // Predicated region
    $region34: #{actor_forward.1} parent=1 // pred_check
      _
    $region35: #{actor_forward.1} parent=1 // pred_check_branch
      %55 = sbr.rel (0) target = $region37
    $region36: #{actor_forward.1} parent=1 // pred_region
      _
    $region37: #{actor_forward.1} parent=1 // pred_fallthru
      _
    // Predicated region
    $region38: #{actor_forward.1} parent=1 // pred_check
      _
    $region39: #{actor_forward.1} parent=1 // pred_check_branch
      %57 = sbr.rel (0) target = $region41
    $region40: #{actor_forward.1} parent=1 // pred_region
      %58 = dma.done [#allocation4], 8192
    $region41: #{actor_forward.1} parent=1 // pred_fallthru
      _
    // Predicated region
    $region42: #{actor_forward.1} parent=1 // pred_check
      _
    $region43: #{actor_forward.1} parent=1 // pred_check_branch
      %60 = sbr.rel (0) target = $region45
    $region44: #{actor_forward.1} parent=1 // pred_region
      %61 = dma.done [#allocation6], 8192
    $region45: #{actor_forward.1} parent=1 // pred_fallthru
      _
    %v62 = vld [vmem:[%s0] sm:$0xff]
    %v63 = vld [vmem:[%s0 + $0x8] sm:$0xff]
    %v64 = vld [vmem:[%s0 + $0x10] sm:$0xff]
    %v65 = vld [vmem:[%s0 + $0x18] sm:$0xff]
    %v66 = vld [vmem:[%s0 + $0x20] sm:$0xff]
    %v67 = vld [vmem:[%s0 + $0x28] sm:$0xff]
    %v68 = vld [vmem:[%s0 + $0x30] sm:$0xff]
    %v69 = vld [vmem:[%s0 + $0x38] sm:$0xff]
    %v70 = vld [vmem:[%s0 + $0x40] sm:$0xff]
    %v71 = vld [vmem:[%s0 + $0x48] sm:$0xff]
    %v72 = vld [vmem:[%s0 + $0x50] sm:$0xff]
    %v73 = vld [vmem:[%s0 + $0x58] sm:$0xff]
    %v74 = vld [vmem:[%s0 + $0x60] sm:$0xff]
    %v75 = vld [vmem:[%s0 + $0x68] sm:$0xff]
    %v76 = vld [vmem:[%s0 + $0x70] sm:$0xff]
    %v77 = vld [vmem:[%s0 + $0x78] sm:$0xff]
    %v78 = vld [vmem:[%s1] sm:$0xff]
    %v79 = vld [vmem:[%s1 + $0x8] sm:$0xff]
    %v80 = vld [vmem:[%s1 + $0x10] sm:$0xff]
    %v81 = vld [vmem:[%s1 + $0x18] sm:$0xff]
    %v82 = vld [vmem:[%s2] sm:$0x3]
    %v84 = vlaneseq
    %v85 = vshrl.u32 %v84, 7
    %v86 = vsub.s32 0, %v85
    %v87 = vrot.slane %v82, %v86
    %v88 = vlaneseq
    %v89 = vshrl.u32 %v88, 7
    %v90 = vsub.s32 1, %v89
    %v91 = vrot.slane %v82, %v90
    %vm94 = vcmask 130048
    %v96 = vsel %vm94, %v62, 0
    %v99 = vsel %vm94, %v63, 0
    %v102 = vsel %vm94, %v64, 0
    %v105 = vsel %vm94, %v65, 0
    %v108 = vsel %vm94, %v66, 0
    %v111 = vsel %vm94, %v67, 0
    %v114 = vsel %vm94, %v68, 0
    %v117 = vsel %vm94, %v69, 0
    %v120 = vsel %vm94, %v70, 0
    %v123 = vsel %vm94, %v71, 0
    %v126 = vsel %vm94, %v72, 0
    %v129 = vsel %vm94, %v73, 0
    %v132 = vsel %vm94, %v74, 0
    %v135 = vsel %vm94, %v75, 0
    %v138 = vsel %vm94, %v76, 0
    %v141 = vsel %vm94, %v77, 0
    %143 = vmatprep.subr.mxu0 0.0
    %144 = vmatpush1.msra.mxu0 0.0
    %145 = vmatprep.subr.mxu0 0.0
    %146 = vmatpush1.msra.mxu0 0.0
    %147 = vmatprep.subr.mxu0 0.0
    %148 = vmatpush1.msra.mxu0 0.0
    %149 = vmatprep.subr.mxu0 0.0
    %150 = vmatpush1.msra.mxu0 0.0
    %151 = vmatprep.subr.mxu0 0.0
    %152 = vmatpush1.msra.mxu0 0.0
    %153 = vmatprep.subr.mxu0 0.0
    %154 = vmatpush1.msra.mxu0 0.0
    %155 = vmatprep.subr.mxu0 0.0
    %156 = vmatpush1.msra.mxu0 0.0
    %157 = vmatprep.subr.mxu0 0.0
    %158 = vmatpush1.msra.mxu0 0.0
    %159 = vmatprep.subr.mxu0 0.0
    %160 = vmatpush1.msra.mxu0 0.0
    %161 = vmatprep.subr.mxu0 0.0
    %162 = vmatpush1.msra.mxu0 0.0
    %163 = vmatprep.subr.mxu0 0.0
    %164 = vmatpush1.msra.mxu0 0.0
    %165 = vmatprep.subr.mxu0 0.0
    %166 = vmatpush1.msra.mxu0 0.0
    %167 = vmatprep.subr.mxu0 0.0
    %168 = vmatpush1.msra.mxu0 0.0
    %169 = vmatprep.subr.mxu0 0.0
    %170 = vmatpush1.msra.mxu0 0.0
    %171 = vmatprep.subr.mxu0 %v81
    %172 = vmatpush1.msra.mxu0 %v80
    %173 = vmatprep.subr.mxu0 %v79
    %174 = vmatpush1.msra.mxu0 %v78
    %175 = vmatprep.subr.mxu0 0.0
    %176 = vmatpush2.msra.mxu0 0.0
    %177 = vmatprep.subr.mxu0 0.0
    %178 = vmatpush2.msra.mxu0 0.0
    %179 = vmatprep.subr.mxu0 0.0
    %180 = vmatpush2.msra.mxu0 0.0
    %181 = vmatprep.subr.mxu0 0.0
    %182 = vmatpush2.msra.mxu0 0.0
    %183 = vmatprep.subr.mxu0 0.0
    %184 = vmatpush2.msra.mxu0 0.0
    %185 = vmatprep.subr.mxu0 0.0
    %186 = vmatpush2.msra.mxu0 0.0
    %187 = vmatprep.subr.mxu0 0.0
    %188 = vmatpush2.msra.mxu0 0.0
    %189 = vmatprep.subr.mxu0 0.0
    %190 = vmatpush2.msra.mxu0 0.0
    %191 = vmatprep.subr.mxu0 0.0
    %192 = vmatpush2.msra.mxu0 0.0
    %193 = vmatprep.subr.mxu0 0.0
    %194 = vmatpush2.msra.mxu0 0.0
    %195 = vmatprep.subr.mxu0 0.0
    %196 = vmatpush2.msra.mxu0 0.0
    %197 = vmatprep.subr.mxu0 0.0
    %198 = vmatpush2.msra.mxu0 0.0
    %199 = vmatprep.subr.mxu0 0.0
    %200 = vmatpush2.msra.mxu0 0.0
    %201 = vmatprep.subr.mxu0 0.0
    %202 = vmatpush2.msra.mxu0 0.0
    %203 = vmatprep.subr.mxu0 0.0
    %204 = vmatpush2.msra.mxu0 0.0
    %205 = vmatprep.subr.mxu0 0.0
    %206 = vmatpush2.msra.mxu0 0.0
    %207 = vmatprep.mubr.f32.mxu0 0.0
    %208 = vmatmul.mubr.f32.gmra.mxu0 %v96
    %v209 = vpop.f32.mrf.mxu0
    %v210 = vadd.f32 %v87, %v209
    %v211 = vpop.f32.mrf.mxu0
    %v212 = vadd.f32 %v91, %v211
    %213 = vmatprep.mubr.f32.mxu0 0.0
    %214 = vmatmul.mubr.f32.gmra.mxu0 %v99
    %v215 = vpop.f32.mrf.mxu0
    %v216 = vadd.f32 %v87, %v215
    %v217 = vpop.f32.mrf.mxu0
    %v218 = vadd.f32 %v91, %v217
    %219 = vmatprep.mubr.f32.mxu0 0.0
    %220 = vmatmul.mubr.f32.gmra.mxu0 %v102
    %v221 = vpop.f32.mrf.mxu0
    %v222 = vadd.f32 %v87, %v221
    %v223 = vpop.f32.mrf.mxu0
    %v224 = vadd.f32 %v91, %v223
    %225 = vmatprep.mubr.f32.mxu0 0.0
    %226 = vmatmul.mubr.f32.gmra.mxu0 %v105
    %v227 = vpop.f32.mrf.mxu0
    %v228 = vadd.f32 %v87, %v227
    %v229 = vpop.f32.mrf.mxu0
    %v230 = vadd.f32 %v91, %v229
    %231 = vmatprep.mubr.f32.mxu0 0.0
    %232 = vmatmul.mubr.f32.gmra.mxu0 %v108
    %v233 = vpop.f32.mrf.mxu0
    %v234 = vadd.f32 %v87, %v233
    %v235 = vpop.f32.mrf.mxu0
    %v236 = vadd.f32 %v91, %v235
    %237 = vmatprep.mubr.f32.mxu0 0.0
    %238 = vmatmul.mubr.f32.gmra.mxu0 %v111
    %v239 = vpop.f32.mrf.mxu0
    %v240 = vadd.f32 %v87, %v239
    %v241 = vpop.f32.mrf.mxu0
    %v242 = vadd.f32 %v91, %v241
    %243 = vmatprep.mubr.f32.mxu0 0.0
    %244 = vmatmul.mubr.f32.gmra.mxu0 %v114
    %v245 = vpop.f32.mrf.mxu0
    %v246 = vadd.f32 %v87, %v245
    %v247 = vpop.f32.mrf.mxu0
    %v248 = vadd.f32 %v91, %v247
    %249 = vmatprep.mubr.f32.mxu0 0.0
    %250 = vmatmul.mubr.f32.gmra.mxu0 %v117
    %v251 = vpop.f32.mrf.mxu0
    %v252 = vadd.f32 %v87, %v251
    %v253 = vpop.f32.mrf.mxu0
    %v254 = vadd.f32 %v91, %v253
    %255 = vmatprep.mubr.f32.mxu0 0.0
    %256 = vmatmul.mubr.f32.gmra.mxu0 %v120
    %v257 = vpop.f32.mrf.mxu0
    %v258 = vadd.f32 %v87, %v257
    %v259 = vpop.f32.mrf.mxu0
    %v260 = vadd.f32 %v91, %v259
    %261 = vmatprep.mubr.f32.mxu0 0.0
    %262 = vmatmul.mubr.f32.gmra.mxu0 %v123
    %v263 = vpop.f32.mrf.mxu0
    %v264 = vadd.f32 %v87, %v263
    %v265 = vpop.f32.mrf.mxu0
    %v266 = vadd.f32 %v91, %v265
    %267 = vmatprep.mubr.f32.mxu0 0.0
    %268 = vmatmul.mubr.f32.gmra.mxu0 %v126
    %v269 = vpop.f32.mrf.mxu0
    %v270 = vadd.f32 %v87, %v269
    %v271 = vpop.f32.mrf.mxu0
    %v272 = vadd.f32 %v91, %v271
    %273 = vmatprep.mubr.f32.mxu0 0.0
    %274 = vmatmul.mubr.f32.gmra.mxu0 %v129
    %v275 = vpop.f32.mrf.mxu0
    %v276 = vadd.f32 %v87, %v275
    %v277 = vpop.f32.mrf.mxu0
    %v278 = vadd.f32 %v91, %v277
    %279 = vmatprep.mubr.f32.mxu0 0.0
    %280 = vmatmul.mubr.f32.gmra.mxu0 %v132
    %v281 = vpop.f32.mrf.mxu0
    %v282 = vadd.f32 %v87, %v281
    %v283 = vpop.f32.mrf.mxu0
    %v284 = vadd.f32 %v91, %v283
    %285 = vmatprep.mubr.f32.mxu0 0.0
    %286 = vmatmul.mubr.f32.gmra.mxu0 %v135
    %v287 = vpop.f32.mrf.mxu0
    %v288 = vadd.f32 %v87, %v287
    %v289 = vpop.f32.mrf.mxu0
    %v290 = vadd.f32 %v91, %v289
    %291 = vmatprep.mubr.f32.mxu0 0.0
    %292 = vmatmul.mubr.f32.gmra.mxu0 %v138
    %v293 = vpop.f32.mrf.mxu0
    %v294 = vadd.f32 %v87, %v293
    %v295 = vpop.f32.mrf.mxu0
    %v296 = vadd.f32 %v91, %v295
    %297 = vmatprep.mubr.f32.mxu0 0.0
    %298 = vmatmul.mubr.f32.gmra.mxu0 %v141
    %v299 = vpop.f32.mrf.mxu0
    %v300 = vadd.f32 %v87, %v299
    %v301 = vpop.f32.mrf.mxu0
    %v302 = vadd.f32 %v91, %v301
    %303 = vdwg.mxu0
    %v304 = vmax.f32 %v210, 0.0
    %v305 = vmax.f32 %v212, 0.0
    %v306 = vmax.f32 %v216, 0.0
    %v307 = vmax.f32 %v218, 0.0
    %v308 = vmax.f32 %v222, 0.0
    %v309 = vmax.f32 %v224, 0.0
    %v310 = vmax.f32 %v228, 0.0
    %v311 = vmax.f32 %v230, 0.0
    %v312 = vmax.f32 %v234, 0.0
    %v313 = vmax.f32 %v236, 0.0
    %v314 = vmax.f32 %v240, 0.0
    %v315 = vmax.f32 %v242, 0.0
    %v316 = vmax.f32 %v246, 0.0
    %v317 = vmax.f32 %v248, 0.0
    %v318 = vmax.f32 %v252, 0.0
    %v319 = vmax.f32 %v254, 0.0
    %v320 = vmax.f32 %v258, 0.0
    %v321 = vmax.f32 %v260, 0.0
    %v322 = vmax.f32 %v264, 0.0
    %v323 = vmax.f32 %v266, 0.0
    %v324 = vmax.f32 %v270, 0.0
    %v325 = vmax.f32 %v272, 0.0
    %v326 = vmax.f32 %v276, 0.0
    %v327 = vmax.f32 %v278, 0.0
    %v328 = vmax.f32 %v282, 0.0
    %v329 = vmax.f32 %v284, 0.0
    %v330 = vmax.f32 %v288, 0.0
    %v331 = vmax.f32 %v290, 0.0
    %v332 = vmax.f32 %v294, 0.0
    %v333 = vmax.f32 %v296, 0.0
    %v334 = vmax.f32 %v300, 0.0
    %v335 = vmax.f32 %v302, 0.0
    %v336 = vld [vmem:[#allocation3] sm:$0xff]
    %v337 = vld [vmem:[#allocation3 + $0x8] sm:$0xff]
    %v338 = vld [vmem:[#allocation3 + $0x10] sm:$0xff]
    %v339 = vld [vmem:[#allocation3 + $0x18] sm:$0xff]
    %v340 = vld [vmem:[#allocation3 + $0x20] sm:$0xff]
    %v341 = vld [vmem:[#allocation3 + $0x28] sm:$0xff]
    %v342 = vld [vmem:[#allocation3 + $0x30] sm:$0xff]
    %v343 = vld [vmem:[#allocation3 + $0x38] sm:$0xff]
    %v344 = vld [vmem:[#allocation3 + $0x40] sm:$0xff]
    %v345 = vld [vmem:[#allocation3 + $0x48] sm:$0xff]
    %v346 = vld [vmem:[#allocation3 + $0x50] sm:$0xff]
    %v347 = vld [vmem:[#allocation3 + $0x58] sm:$0xff]
    %v348 = vld [vmem:[#allocation3 + $0x60] sm:$0xff]
    %v349 = vld [vmem:[#allocation3 + $0x68] sm:$0xff]
    %v350 = vld [vmem:[#allocation3 + $0x70] sm:$0xff]
    %v351 = vld [vmem:[#allocation3 + $0x78] sm:$0xff]
    %v352 = vld [vmem:[#allocation3 + $0x80] sm:$0xff]
    %v353 = vld [vmem:[#allocation3 + $0x88] sm:$0xff]
    %v354 = vld [vmem:[#allocation3 + $0x90] sm:$0xff]
    %v355 = vld [vmem:[#allocation3 + $0x98] sm:$0xff]
    %v356 = vld [vmem:[#allocation3 + $0xa0] sm:$0xff]
    %v357 = vld [vmem:[#allocation3 + $0xa8] sm:$0xff]
    %v358 = vld [vmem:[#allocation3 + $0xb0] sm:$0xff]
    %v359 = vld [vmem:[#allocation3 + $0xb8] sm:$0xff]
    %v360 = vld [vmem:[#allocation3 + $0xc0] sm:$0xff]
    %v361 = vld [vmem:[#allocation3 + $0xc8] sm:$0xff]
    %v362 = vld [vmem:[#allocation3 + $0xd0] sm:$0xff]
    %v363 = vld [vmem:[#allocation3 + $0xd8] sm:$0xff]
    %v364 = vld [vmem:[#allocation3 + $0xe0] sm:$0xff]
    %v365 = vld [vmem:[#allocation3 + $0xe8] sm:$0xff]
    %v366 = vld [vmem:[#allocation3 + $0xf0] sm:$0xff]
    %v367 = vld [vmem:[#allocation3 + $0xf8] sm:$0xff]
    %v368 = vld [vmem:[#allocation3 + $0x100] sm:$0xff]
    %v369 = vld [vmem:[#allocation3 + $0x108] sm:$0xff]
    %v370 = vld [vmem:[#allocation3 + $0x110] sm:$0xff]
    %v371 = vld [vmem:[#allocation3 + $0x118] sm:$0xff]
    %v372 = vld [vmem:[#allocation3 + $0x120] sm:$0xff]
    %v373 = vld [vmem:[#allocation3 + $0x128] sm:$0xff]
    %v374 = vld [vmem:[#allocation3 + $0x130] sm:$0xff]
    %v375 = vld [vmem:[#allocation3 + $0x138] sm:$0xff]
    %v376 = vld [vmem:[#allocation3 + $0x140] sm:$0xff]
    %v377 = vld [vmem:[#allocation3 + $0x148] sm:$0xff]
    %v378 = vld [vmem:[#allocation3 + $0x150] sm:$0xff]
    %v379 = vld [vmem:[#allocation3 + $0x158] sm:$0xff]
    %v380 = vld [vmem:[#allocation3 + $0x160] sm:$0xff]
    %v381 = vld [vmem:[#allocation3 + $0x168] sm:$0xff]
    %v382 = vld [vmem:[#allocation3 + $0x170] sm:$0xff]
    %v383 = vld [vmem:[#allocation3 + $0x178] sm:$0xff]
    %v384 = vld [vmem:[#allocation3 + $0x180] sm:$0xff]
    %v385 = vld [vmem:[#allocation3 + $0x188] sm:$0xff]
    %v386 = vld [vmem:[#allocation3 + $0x190] sm:$0xff]
    %v387 = vld [vmem:[#allocation3 + $0x198] sm:$0xff]
    %v388 = vld [vmem:[#allocation3 + $0x1a0] sm:$0xff]
    %v389 = vld [vmem:[#allocation3 + $0x1a8] sm:$0xff]
    %v390 = vld [vmem:[#allocation3 + $0x1b0] sm:$0xff]
    %v391 = vld [vmem:[#allocation3 + $0x1b8] sm:$0xff]
    %v392 = vld [vmem:[#allocation3 + $0x1c0] sm:$0xff]
    %v393 = vld [vmem:[#allocation3 + $0x1c8] sm:$0xff]
    %v394 = vld [vmem:[#allocation3 + $0x1d0] sm:$0xff]
    %v395 = vld [vmem:[#allocation3 + $0x1d8] sm:$0xff]
    %v396 = vld [vmem:[#allocation3 + $0x1e0] sm:$0xff]
    %v397 = vld [vmem:[#allocation3 + $0x1e8] sm:$0xff]
    %v398 = vld [vmem:[#allocation3 + $0x1f0] sm:$0xff]
    %v399 = vld [vmem:[#allocation3 + $0x1f8] sm:$0xff]
    %v400 = vld [vmem:[%s4] sm:$0x3]
    %v402 = vlaneseq
    %v403 = vshrl.u32 %v402, 7
    %v404 = vsub.s32 0, %v403
    %v405 = vrot.slane %v400, %v404
    %v406 = vlaneseq
    %v407 = vshrl.u32 %v406, 7
    %v408 = vsub.s32 1, %v407
    %v409 = vrot.slane %v400, %v408
    %412 = vmatprep.subr.mxu0 %v367
    %413 = vmatpush1.msra.mxu0 %v366
    %414 = vmatprep.subr.mxu0 %v365
    %415 = vmatpush1.msra.mxu0 %v364
    %416 = vmatprep.subr.mxu0 %v363
    %417 = vmatpush1.msra.mxu0 %v362
    %418 = vmatprep.subr.mxu0 %v361
    %419 = vmatpush1.msra.mxu0 %v360
    %420 = vmatprep.subr.mxu0 %v359
    %421 = vmatpush1.msra.mxu0 %v358
    %422 = vmatprep.subr.mxu0 %v357
    %423 = vmatpush1.msra.mxu0 %v356
    %424 = vmatprep.subr.mxu0 %v355
    %425 = vmatpush1.msra.mxu0 %v354
    %426 = vmatprep.subr.mxu0 %v353
    %427 = vmatpush1.msra.mxu0 %v352
    %428 = vmatprep.subr.mxu0 %v351
    %429 = vmatpush1.msra.mxu0 %v350
    %430 = vmatprep.subr.mxu0 %v349
    %431 = vmatpush1.msra.mxu0 %v348
    %432 = vmatprep.subr.mxu0 %v347
    %433 = vmatpush1.msra.mxu0 %v346
    %434 = vmatprep.subr.mxu0 %v345
    %435 = vmatpush1.msra.mxu0 %v344
    %436 = vmatprep.subr.mxu0 %v343
    %437 = vmatpush1.msra.mxu0 %v342
    %438 = vmatprep.subr.mxu0 %v341
    %439 = vmatpush1.msra.mxu0 %v340
    %440 = vmatprep.subr.mxu0 %v339
    %441 = vmatpush1.msra.mxu0 %v338
    %442 = vmatprep.subr.mxu0 %v337
    %443 = vmatpush1.msra.mxu0 %v336
    %444 = vmatprep.subr.mxu0 %v399
    %445 = vmatpush2.msra.mxu0 %v398
    %446 = vmatprep.subr.mxu0 %v397
    %447 = vmatpush2.msra.mxu0 %v396
    %448 = vmatprep.subr.mxu0 %v395
    %449 = vmatpush2.msra.mxu0 %v394
    %450 = vmatprep.subr.mxu0 %v393
    %451 = vmatpush2.msra.mxu0 %v392
    %452 = vmatprep.subr.mxu0 %v391
    %453 = vmatpush2.msra.mxu0 %v390
    %454 = vmatprep.subr.mxu0 %v389
    %455 = vmatpush2.msra.mxu0 %v388
    %456 = vmatprep.subr.mxu0 %v387
    %457 = vmatpush2.msra.mxu0 %v386
    %458 = vmatprep.subr.mxu0 %v385
    %459 = vmatpush2.msra.mxu0 %v384
    %460 = vmatprep.subr.mxu0 %v383
    %461 = vmatpush2.msra.mxu0 %v382
    %462 = vmatprep.subr.mxu0 %v381
    %463 = vmatpush2.msra.mxu0 %v380
    %464 = vmatprep.subr.mxu0 %v379
    %465 = vmatpush2.msra.mxu0 %v378
    %466 = vmatprep.subr.mxu0 %v377
    %467 = vmatpush2.msra.mxu0 %v376
    %468 = vmatprep.subr.mxu0 %v375
    %469 = vmatpush2.msra.mxu0 %v374
    %470 = vmatprep.subr.mxu0 %v373
    %471 = vmatpush2.msra.mxu0 %v372
    %472 = vmatprep.subr.mxu0 %v371
    %473 = vmatpush2.msra.mxu0 %v370
    %474 = vmatprep.subr.mxu0 %v369
    %475 = vmatpush2.msra.mxu0 %v368
    %476 = vmatprep.mubr.f32.mxu0 %v305
    %477 = vmatmul.mubr.f32.gmra.mxu0 %v304
    %v478 = vpop.f32.mrf.mxu0
    %v479 = vadd.f32 %v405, %v478
    %v480 = vpop.f32.mrf.mxu0
    %v481 = vadd.f32 %v409, %v480
    %482 = vmatprep.mubr.f32.mxu0 %v307
    %483 = vmatmul.mubr.f32.gmra.mxu0 %v306
    %v484 = vpop.f32.mrf.mxu0
    %v485 = vadd.f32 %v405, %v484
    %v486 = vpop.f32.mrf.mxu0
    %v487 = vadd.f32 %v409, %v486
    %488 = vmatprep.mubr.f32.mxu0 %v309
    %489 = vmatmul.mubr.f32.gmra.mxu0 %v308
    %v490 = vpop.f32.mrf.mxu0
    %v491 = vadd.f32 %v405, %v490
    %v492 = vpop.f32.mrf.mxu0
    %v493 = vadd.f32 %v409, %v492
    %494 = vmatprep.mubr.f32.mxu0 %v311
    %495 = vmatmul.mubr.f32.gmra.mxu0 %v310
    %v496 = vpop.f32.mrf.mxu0
    %v497 = vadd.f32 %v405, %v496
    %v498 = vpop.f32.mrf.mxu0
    %v499 = vadd.f32 %v409, %v498
    %500 = vmatprep.mubr.f32.mxu0 %v313
    %501 = vmatmul.mubr.f32.gmra.mxu0 %v312
    %v502 = vpop.f32.mrf.mxu0
    %v503 = vadd.f32 %v405, %v502
    %v504 = vpop.f32.mrf.mxu0
    %v505 = vadd.f32 %v409, %v504
    %506 = vmatprep.mubr.f32.mxu0 %v315
    %507 = vmatmul.mubr.f32.gmra.mxu0 %v314
    %v508 = vpop.f32.mrf.mxu0
    %v509 = vadd.f32 %v405, %v508
    %v510 = vpop.f32.mrf.mxu0
    %v511 = vadd.f32 %v409, %v510
    %512 = vmatprep.mubr.f32.mxu0 %v317
    %513 = vmatmul.mubr.f32.gmra.mxu0 %v316
    %v514 = vpop.f32.mrf.mxu0
    %v515 = vadd.f32 %v405, %v514
    %v516 = vpop.f32.mrf.mxu0
    %v517 = vadd.f32 %v409, %v516
    %518 = vmatprep.mubr.f32.mxu0 %v319
    %519 = vmatmul.mubr.f32.gmra.mxu0 %v318
    %v520 = vpop.f32.mrf.mxu0
    %v521 = vadd.f32 %v405, %v520
    %v522 = vpop.f32.mrf.mxu0
    %v523 = vadd.f32 %v409, %v522
    %524 = vmatprep.mubr.f32.mxu0 %v321
    %525 = vmatmul.mubr.f32.gmra.mxu0 %v320
    %v526 = vpop.f32.mrf.mxu0
    %v527 = vadd.f32 %v405, %v526
    %v528 = vpop.f32.mrf.mxu0
    %v529 = vadd.f32 %v409, %v528
    %530 = vmatprep.mubr.f32.mxu0 %v323
    %531 = vmatmul.mubr.f32.gmra.mxu0 %v322
    %v532 = vpop.f32.mrf.mxu0
    %v533 = vadd.f32 %v405, %v532
    %v534 = vpop.f32.mrf.mxu0
    %v535 = vadd.f32 %v409, %v534
    %536 = vmatprep.mubr.f32.mxu0 %v325
    %537 = vmatmul.mubr.f32.gmra.mxu0 %v324
    %v538 = vpop.f32.mrf.mxu0
    %v539 = vadd.f32 %v405, %v538
    %v540 = vpop.f32.mrf.mxu0
    %v541 = vadd.f32 %v409, %v540
    %542 = vmatprep.mubr.f32.mxu0 %v327
    %543 = vmatmul.mubr.f32.gmra.mxu0 %v326
    %v544 = vpop.f32.mrf.mxu0
    %v545 = vadd.f32 %v405, %v544
    %v546 = vpop.f32.mrf.mxu0
    %v547 = vadd.f32 %v409, %v546
    %548 = vmatprep.mubr.f32.mxu0 %v329
    %549 = vmatmul.mubr.f32.gmra.mxu0 %v328
    %v550 = vpop.f32.mrf.mxu0
    %v551 = vadd.f32 %v405, %v550
    %v552 = vpop.f32.mrf.mxu0
    %v553 = vadd.f32 %v409, %v552
    %554 = vmatprep.mubr.f32.mxu0 %v331
    %555 = vmatmul.mubr.f32.gmra.mxu0 %v330
    %v556 = vpop.f32.mrf.mxu0
    %v557 = vadd.f32 %v405, %v556
    %v558 = vpop.f32.mrf.mxu0
    %v559 = vadd.f32 %v409, %v558
    %560 = vmatprep.mubr.f32.mxu0 %v333
    %561 = vmatmul.mubr.f32.gmra.mxu0 %v332
    %v562 = vpop.f32.mrf.mxu0
    %v563 = vadd.f32 %v405, %v562
    %v564 = vpop.f32.mrf.mxu0
    %v565 = vadd.f32 %v409, %v564
    %566 = vmatprep.mubr.f32.mxu0 %v335
    %567 = vmatmul.mubr.f32.gmra.mxu0 %v334
    %v568 = vpop.f32.mrf.mxu0
    %v569 = vadd.f32 %v405, %v568
    %v570 = vpop.f32.mrf.mxu0
    %v571 = vadd.f32 %v409, %v570
    %572 = vdwg.mxu0
    %v573 = vmax.f32 %v479, 0.0
    %v574 = vmax.f32 %v481, 0.0
    %v575 = vmax.f32 %v485, 0.0
    %v576 = vmax.f32 %v487, 0.0
    %v577 = vmax.f32 %v491, 0.0
    %v578 = vmax.f32 %v493, 0.0
    %v579 = vmax.f32 %v497, 0.0
    %v580 = vmax.f32 %v499, 0.0
    %v581 = vmax.f32 %v503, 0.0
    %v582 = vmax.f32 %v505, 0.0
    %v583 = vmax.f32 %v509, 0.0
    %v584 = vmax.f32 %v511, 0.0
    %v585 = vmax.f32 %v515, 0.0
    %v586 = vmax.f32 %v517, 0.0
    %v587 = vmax.f32 %v521, 0.0
    %v588 = vmax.f32 %v523, 0.0
    %v589 = vmax.f32 %v527, 0.0
    %v590 = vmax.f32 %v529, 0.0
    %v591 = vmax.f32 %v533, 0.0
    %v592 = vmax.f32 %v535, 0.0
    %v593 = vmax.f32 %v539, 0.0
    %v594 = vmax.f32 %v541, 0.0
    %v595 = vmax.f32 %v545, 0.0
    %v596 = vmax.f32 %v547, 0.0
    %v597 = vmax.f32 %v551, 0.0
    %v598 = vmax.f32 %v553, 0.0
    %v599 = vmax.f32 %v557, 0.0
    %v600 = vmax.f32 %v559, 0.0
    %v601 = vmax.f32 %v563, 0.0
    %v602 = vmax.f32 %v565, 0.0
    %v603 = vmax.f32 %v569, 0.0
    %v604 = vmax.f32 %v571, 0.0
    %v605 = vld [vmem:[#allocation5] sm:$0xff]
    %v606 = vld [vmem:[#allocation5 + $0x8] sm:$0xff]
    %v607 = vld [vmem:[#allocation5 + $0x10] sm:$0xff]
    %v608 = vld [vmem:[#allocation5 + $0x18] sm:$0xff]
    %v609 = vld [vmem:[#allocation5 + $0x20] sm:$0xff]
    %v610 = vld [vmem:[#allocation5 + $0x28] sm:$0xff]
    %v611 = vld [vmem:[#allocation5 + $0x30] sm:$0xff]
    %v612 = vld [vmem:[#allocation5 + $0x38] sm:$0xff]
    %v613 = vld [vmem:[#allocation5 + $0x40] sm:$0xff]
    %v614 = vld [vmem:[#allocation5 + $0x48] sm:$0xff]
    %v615 = vld [vmem:[#allocation5 + $0x50] sm:$0xff]
    %v616 = vld [vmem:[#allocation5 + $0x58] sm:$0xff]
    %v617 = vld [vmem:[#allocation5 + $0x60] sm:$0xff]
    %v618 = vld [vmem:[#allocation5 + $0x68] sm:$0xff]
    %v619 = vld [vmem:[#allocation5 + $0x70] sm:$0xff]
    %v620 = vld [vmem:[#allocation5 + $0x78] sm:$0xff]
    %v621 = vld [vmem:[#allocation5 + $0x80] sm:$0xff]
    %v622 = vld [vmem:[#allocation5 + $0x88] sm:$0xff]
    %v623 = vld [vmem:[#allocation5 + $0x90] sm:$0xff]
    %v624 = vld [vmem:[#allocation5 + $0x98] sm:$0xff]
    %v625 = vld [vmem:[#allocation5 + $0xa0] sm:$0xff]
    %v626 = vld [vmem:[#allocation5 + $0xa8] sm:$0xff]
    %v627 = vld [vmem:[#allocation5 + $0xb0] sm:$0xff]
    %v628 = vld [vmem:[#allocation5 + $0xb8] sm:$0xff]
    %v629 = vld [vmem:[#allocation5 + $0xc0] sm:$0xff]
    %v630 = vld [vmem:[#allocation5 + $0xc8] sm:$0xff]
    %v631 = vld [vmem:[#allocation5 + $0xd0] sm:$0xff]
    %v632 = vld [vmem:[#allocation5 + $0xd8] sm:$0xff]
    %v633 = vld [vmem:[#allocation5 + $0xe0] sm:$0xff]
    %v634 = vld [vmem:[#allocation5 + $0xe8] sm:$0xff]
    %v635 = vld [vmem:[#allocation5 + $0xf0] sm:$0xff]
    %v636 = vld [vmem:[#allocation5 + $0xf8] sm:$0xff]
    %v637 = vld [vmem:[#allocation5 + $0x100] sm:$0xff]
    %v638 = vld [vmem:[#allocation5 + $0x108] sm:$0xff]
    %v639 = vld [vmem:[#allocation5 + $0x110] sm:$0xff]
    %v640 = vld [vmem:[#allocation5 + $0x118] sm:$0xff]
    %v641 = vld [vmem:[#allocation5 + $0x120] sm:$0xff]
    %v642 = vld [vmem:[#allocation5 + $0x128] sm:$0xff]
    %v643 = vld [vmem:[#allocation5 + $0x130] sm:$0xff]
    %v644 = vld [vmem:[#allocation5 + $0x138] sm:$0xff]
    %v645 = vld [vmem:[#allocation5 + $0x140] sm:$0xff]
    %v646 = vld [vmem:[#allocation5 + $0x148] sm:$0xff]
    %v647 = vld [vmem:[#allocation5 + $0x150] sm:$0xff]
    %v648 = vld [vmem:[#allocation5 + $0x158] sm:$0xff]
    %v649 = vld [vmem:[#allocation5 + $0x160] sm:$0xff]
    %v650 = vld [vmem:[#allocation5 + $0x168] sm:$0xff]
    %v651 = vld [vmem:[#allocation5 + $0x170] sm:$0xff]
    %v652 = vld [vmem:[#allocation5 + $0x178] sm:$0xff]
    %v653 = vld [vmem:[#allocation5 + $0x180] sm:$0xff]
    %v654 = vld [vmem:[#allocation5 + $0x188] sm:$0xff]
    %v655 = vld [vmem:[#allocation5 + $0x190] sm:$0xff]
    %v656 = vld [vmem:[#allocation5 + $0x198] sm:$0xff]
    %v657 = vld [vmem:[#allocation5 + $0x1a0] sm:$0xff]
    %v658 = vld [vmem:[#allocation5 + $0x1a8] sm:$0xff]
    %v659 = vld [vmem:[#allocation5 + $0x1b0] sm:$0xff]
    %v660 = vld [vmem:[#allocation5 + $0x1b8] sm:$0xff]
    %v661 = vld [vmem:[#allocation5 + $0x1c0] sm:$0xff]
    %v662 = vld [vmem:[#allocation5 + $0x1c8] sm:$0xff]
    %v663 = vld [vmem:[#allocation5 + $0x1d0] sm:$0xff]
    %v664 = vld [vmem:[#allocation5 + $0x1d8] sm:$0xff]
    %v665 = vld [vmem:[#allocation5 + $0x1e0] sm:$0xff]
    %v666 = vld [vmem:[#allocation5 + $0x1e8] sm:$0xff]
    %v667 = vld [vmem:[#allocation5 + $0x1f0] sm:$0xff]
    %v668 = vld [vmem:[#allocation5 + $0x1f8] sm:$0xff]
    %v669 = vld [vmem:[%s6] sm:$0x3]
    %v671 = vlaneseq
    %v672 = vshrl.u32 %v671, 7
    %v673 = vsub.s32 0, %v672
    %v674 = vrot.slane %v669, %v673
    %v675 = vlaneseq
    %v676 = vshrl.u32 %v675, 7
    %v677 = vsub.s32 1, %v676
    %v678 = vrot.slane %v669, %v677
    %681 = vmatprep.subr.mxu0 %v636
    %682 = vmatpush1.msra.mxu0 %v635
    %683 = vmatprep.subr.mxu0 %v634
    %684 = vmatpush1.msra.mxu0 %v633
    %685 = vmatprep.subr.mxu0 %v632
    %686 = vmatpush1.msra.mxu0 %v631
    %687 = vmatprep.subr.mxu0 %v630
    %688 = vmatpush1.msra.mxu0 %v629
    %689 = vmatprep.subr.mxu0 %v628
    %690 = vmatpush1.msra.mxu0 %v627
    %691 = vmatprep.subr.mxu0 %v626
    %692 = vmatpush1.msra.mxu0 %v625
    %693 = vmatprep.subr.mxu0 %v624
    %694 = vmatpush1.msra.mxu0 %v623
    %695 = vmatprep.subr.mxu0 %v622
    %696 = vmatpush1.msra.mxu0 %v621
    %697 = vmatprep.subr.mxu0 %v620
    %698 = vmatpush1.msra.mxu0 %v619
    %699 = vmatprep.subr.mxu0 %v618
    %700 = vmatpush1.msra.mxu0 %v617
    %701 = vmatprep.subr.mxu0 %v616
    %702 = vmatpush1.msra.mxu0 %v615
    %703 = vmatprep.subr.mxu0 %v614
    %704 = vmatpush1.msra.mxu0 %v613
    %705 = vmatprep.subr.mxu0 %v612
    %706 = vmatpush1.msra.mxu0 %v611
    %707 = vmatprep.subr.mxu0 %v610
    %708 = vmatpush1.msra.mxu0 %v609
    %709 = vmatprep.subr.mxu0 %v608
    %710 = vmatpush1.msra.mxu0 %v607
    %711 = vmatprep.subr.mxu0 %v606
    %712 = vmatpush1.msra.mxu0 %v605
    %713 = vmatprep.subr.mxu0 %v668
    %714 = vmatpush2.msra.mxu0 %v667
    %715 = vmatprep.subr.mxu0 %v666
    %716 = vmatpush2.msra.mxu0 %v665
    %717 = vmatprep.subr.mxu0 %v664
    %718 = vmatpush2.msra.mxu0 %v663
    %719 = vmatprep.subr.mxu0 %v662
    %720 = vmatpush2.msra.mxu0 %v661
    %721 = vmatprep.subr.mxu0 %v660
    %722 = vmatpush2.msra.mxu0 %v659
    %723 = vmatprep.subr.mxu0 %v658
    %724 = vmatpush2.msra.mxu0 %v657
    %725 = vmatprep.subr.mxu0 %v656
    %726 = vmatpush2.msra.mxu0 %v655
    %727 = vmatprep.subr.mxu0 %v654
    %728 = vmatpush2.msra.mxu0 %v653
    %729 = vmatprep.subr.mxu0 %v652
    %730 = vmatpush2.msra.mxu0 %v651
    %731 = vmatprep.subr.mxu0 %v650
    %732 = vmatpush2.msra.mxu0 %v649
    %733 = vmatprep.subr.mxu0 %v648
    %734 = vmatpush2.msra.mxu0 %v647
    %735 = vmatprep.subr.mxu0 %v646
    %736 = vmatpush2.msra.mxu0 %v645
    %737 = vmatprep.subr.mxu0 %v644
    %738 = vmatpush2.msra.mxu0 %v643
    %739 = vmatprep.subr.mxu0 %v642
    %740 = vmatpush2.msra.mxu0 %v641
    %741 = vmatprep.subr.mxu0 %v640
    %742 = vmatpush2.msra.mxu0 %v639
    %743 = vmatprep.subr.mxu0 %v638
    %744 = vmatpush2.msra.mxu0 %v637
    %745 = vmatprep.mubr.f32.mxu0 %v574
    %746 = vmatmul.mubr.f32.gmra.mxu0 %v573
    %v747 = vpop.f32.mrf.mxu0
    %v748 = vadd.f32 %v674, %v747
    %v749 = vpop.f32.mrf.mxu0
    %v750 = vadd.f32 %v678, %v749
    %751 = vmatprep.mubr.f32.mxu0 %v576
    %752 = vmatmul.mubr.f32.gmra.mxu0 %v575
    %v753 = vpop.f32.mrf.mxu0
    %v754 = vadd.f32 %v674, %v753
    %v755 = vpop.f32.mrf.mxu0
    %v756 = vadd.f32 %v678, %v755
    %757 = vmatprep.mubr.f32.mxu0 %v578
    %758 = vmatmul.mubr.f32.gmra.mxu0 %v577
    %v759 = vpop.f32.mrf.mxu0
    %v760 = vadd.f32 %v674, %v759
    %v761 = vpop.f32.mrf.mxu0
    %v762 = vadd.f32 %v678, %v761
    %763 = vmatprep.mubr.f32.mxu0 %v580
    %764 = vmatmul.mubr.f32.gmra.mxu0 %v579
    %v765 = vpop.f32.mrf.mxu0
    %v766 = vadd.f32 %v674, %v765
    %v767 = vpop.f32.mrf.mxu0
    %v768 = vadd.f32 %v678, %v767
    %769 = vmatprep.mubr.f32.mxu0 %v582
    %770 = vmatmul.mubr.f32.gmra.mxu0 %v581
    %v771 = vpop.f32.mrf.mxu0
    %v772 = vadd.f32 %v674, %v771
    %v773 = vpop.f32.mrf.mxu0
    %v774 = vadd.f32 %v678, %v773
    %775 = vmatprep.mubr.f32.mxu0 %v584
    %776 = vmatmul.mubr.f32.gmra.mxu0 %v583
    %v777 = vpop.f32.mrf.mxu0
    %v778 = vadd.f32 %v674, %v777
    %v779 = vpop.f32.mrf.mxu0
    %v780 = vadd.f32 %v678, %v779
    %781 = vmatprep.mubr.f32.mxu0 %v586
    %782 = vmatmul.mubr.f32.gmra.mxu0 %v585
    %v783 = vpop.f32.mrf.mxu0
    %v784 = vadd.f32 %v674, %v783
    %v785 = vpop.f32.mrf.mxu0
    %v786 = vadd.f32 %v678, %v785
    %787 = vmatprep.mubr.f32.mxu0 %v588
    %788 = vmatmul.mubr.f32.gmra.mxu0 %v587
    %v789 = vpop.f32.mrf.mxu0
    %v790 = vadd.f32 %v674, %v789
    %v791 = vpop.f32.mrf.mxu0
    %v792 = vadd.f32 %v678, %v791
    %793 = vmatprep.mubr.f32.mxu0 %v590
    %794 = vmatmul.mubr.f32.gmra.mxu0 %v589
    %v795 = vpop.f32.mrf.mxu0
    %v796 = vadd.f32 %v674, %v795
    %v797 = vpop.f32.mrf.mxu0
    %v798 = vadd.f32 %v678, %v797
    %799 = vmatprep.mubr.f32.mxu0 %v592
    %800 = vmatmul.mubr.f32.gmra.mxu0 %v591
    %v801 = vpop.f32.mrf.mxu0
    %v802 = vadd.f32 %v674, %v801
    %v803 = vpop.f32.mrf.mxu0
    %v804 = vadd.f32 %v678, %v803
    %805 = vmatprep.mubr.f32.mxu0 %v594
    %806 = vmatmul.mubr.f32.gmra.mxu0 %v593
    %v807 = vpop.f32.mrf.mxu0
    %v808 = vadd.f32 %v674, %v807
    %v809 = vpop.f32.mrf.mxu0
    %v810 = vadd.f32 %v678, %v809
    %811 = vmatprep.mubr.f32.mxu0 %v596
    %812 = vmatmul.mubr.f32.gmra.mxu0 %v595
    %v813 = vpop.f32.mrf.mxu0
    %v814 = vadd.f32 %v674, %v813
    %v815 = vpop.f32.mrf.mxu0
    %v816 = vadd.f32 %v678, %v815
    %817 = vmatprep.mubr.f32.mxu0 %v598
    %818 = vmatmul.mubr.f32.gmra.mxu0 %v597
    %v819 = vpop.f32.mrf.mxu0
    %v820 = vadd.f32 %v674, %v819
    %v821 = vpop.f32.mrf.mxu0
    %v822 = vadd.f32 %v678, %v821
    %823 = vmatprep.mubr.f32.mxu0 %v600
    %824 = vmatmul.mubr.f32.gmra.mxu0 %v599
    %v825 = vpop.f32.mrf.mxu0
    %v826 = vadd.f32 %v674, %v825
    %v827 = vpop.f32.mrf.mxu0
    %v828 = vadd.f32 %v678, %v827
    %829 = vmatprep.mubr.f32.mxu0 %v602
    %830 = vmatmul.mubr.f32.gmra.mxu0 %v601
    %v831 = vpop.f32.mrf.mxu0
    %v832 = vadd.f32 %v674, %v831
    %v833 = vpop.f32.mrf.mxu0
    %v834 = vadd.f32 %v678, %v833
    %835 = vmatprep.mubr.f32.mxu0 %v604
    %836 = vmatmul.mubr.f32.gmra.mxu0 %v603
    %v837 = vpop.f32.mrf.mxu0
    %v838 = vadd.f32 %v674, %v837
    %v839 = vpop.f32.mrf.mxu0
    %v840 = vadd.f32 %v678, %v839
    %841 = vdwg.mxu0
    %v842 = vmax.f32 %v748, 0.0
    %v843 = vmax.f32 %v750, 0.0
    %v844 = vmax.f32 %v754, 0.0
    %v845 = vmax.f32 %v756, 0.0
    %v846 = vmax.f32 %v760, 0.0
    %v847 = vmax.f32 %v762, 0.0
    %v848 = vmax.f32 %v766, 0.0
    %v849 = vmax.f32 %v768, 0.0
    %v850 = vmax.f32 %v772, 0.0
    %v851 = vmax.f32 %v774, 0.0
    %v852 = vmax.f32 %v778, 0.0
    %v853 = vmax.f32 %v780, 0.0
    %v854 = vmax.f32 %v784, 0.0
    %v855 = vmax.f32 %v786, 0.0
    %v856 = vmax.f32 %v790, 0.0
    %v857 = vmax.f32 %v792, 0.0
    %v858 = vmax.f32 %v796, 0.0
    %v859 = vmax.f32 %v798, 0.0
    %v860 = vmax.f32 %v802, 0.0
    %v861 = vmax.f32 %v804, 0.0
    %v862 = vmax.f32 %v808, 0.0
    %v863 = vmax.f32 %v810, 0.0
    %v864 = vmax.f32 %v814, 0.0
    %v865 = vmax.f32 %v816, 0.0
    %v866 = vmax.f32 %v820, 0.0
    %v867 = vmax.f32 %v822, 0.0
    %v868 = vmax.f32 %v826, 0.0
    %v869 = vmax.f32 %v828, 0.0
    %v870 = vmax.f32 %v832, 0.0
    %v871 = vmax.f32 %v834, 0.0
    %v872 = vmax.f32 %v838, 0.0
    %v873 = vmax.f32 %v840, 0.0
    %v874 = vld [vmem:[%s7] sm:$0x3]
    %v876 = vlaneseq
    %v877 = vshrl.u32 %v876, 7
    %v878 = vsub.s32 0, %v877
    %v879 = vrot.slane %v874, %v878
    %v880 = vlaneseq
    %v881 = vshrl.u32 %v880, 7
    %v882 = vsub.s32 1, %v881
    %v883 = vrot.slane %v874, %v882
    %v886 = vmul.f32 %v842, %v879
    %v887 = vmul.f32 %v843, %v883
    %v888 = vmul.f32 %v844, %v879
    %v889 = vmul.f32 %v845, %v883
    %v890 = vmul.f32 %v846, %v879
    %v891 = vmul.f32 %v847, %v883
    %v892 = vmul.f32 %v848, %v879
    %v893 = vmul.f32 %v849, %v883
    %v894 = vmul.f32 %v850, %v879
    %v895 = vmul.f32 %v851, %v883
    %v896 = vmul.f32 %v852, %v879
    %v897 = vmul.f32 %v853, %v883
    %v898 = vmul.f32 %v854, %v879
    %v899 = vmul.f32 %v855, %v883
    %v900 = vmul.f32 %v856, %v879
    %v901 = vmul.f32 %v857, %v883
    %v902 = vmul.f32 %v858, %v879
    %v903 = vmul.f32 %v859, %v883
    %v904 = vmul.f32 %v860, %v879
    %v905 = vmul.f32 %v861, %v883
    %v906 = vmul.f32 %v862, %v879
    %v907 = vmul.f32 %v863, %v883
    %v908 = vmul.f32 %v864, %v879
    %v909 = vmul.f32 %v865, %v883
    %v910 = vmul.f32 %v866, %v879
    %v911 = vmul.f32 %v867, %v883
    %v912 = vmul.f32 %v868, %v879
    %v913 = vmul.f32 %v869, %v883
    %v914 = vmul.f32 %v870, %v879
    %v915 = vmul.f32 %v871, %v883
    %v916 = vmul.f32 %v872, %v879
    %v917 = vmul.f32 %v873, %v883
    %v918 = vadd.f32 %v886, %v887
    %919 = vadd.xlane.f32.xlu0 %v918
    %v920 = vpop.xlane.xlu0 %919
    %v921 = vadd.f32 %v888, %v889
    %922 = vadd.xlane.f32.xlu0 %v921
    %v923 = vpop.xlane.xlu0 %922
    %v924 = vadd.f32 %v890, %v891
    %925 = vadd.xlane.f32.xlu0 %v924
    %v926 = vpop.xlane.xlu0 %925
    %v927 = vadd.f32 %v892, %v893
    %928 = vadd.xlane.f32.xlu0 %v927
    %v929 = vpop.xlane.xlu0 %928
    %v930 = vadd.f32 %v894, %v895
    %931 = vadd.xlane.f32.xlu0 %v930
    %v932 = vpop.xlane.xlu0 %931
    %v933 = vadd.f32 %v896, %v897
    %934 = vadd.xlane.f32.xlu0 %v933
    %v935 = vpop.xlane.xlu0 %934
    %v936 = vadd.f32 %v898, %v899
    %937 = vadd.xlane.f32.xlu0 %v936
    %v938 = vpop.xlane.xlu0 %937
    %v939 = vadd.f32 %v900, %v901
    %940 = vadd.xlane.f32.xlu0 %v939
    %v941 = vpop.xlane.xlu0 %940
    %v942 = vadd.f32 %v902, %v903
    %943 = vadd.xlane.f32.xlu0 %v942
    %v944 = vpop.xlane.xlu0 %943
    %v945 = vadd.f32 %v904, %v905
    %946 = vadd.xlane.f32.xlu0 %v945
    %v947 = vpop.xlane.xlu0 %946
    %v948 = vadd.f32 %v906, %v907
    %949 = vadd.xlane.f32.xlu0 %v948
    %v950 = vpop.xlane.xlu0 %949
    %v951 = vadd.f32 %v908, %v909
    %952 = vadd.xlane.f32.xlu0 %v951
    %v953 = vpop.xlane.xlu0 %952
    %v954 = vadd.f32 %v910, %v911
    %955 = vadd.xlane.f32.xlu0 %v954
    %v956 = vpop.xlane.xlu0 %955
    %v957 = vadd.f32 %v912, %v913
    %958 = vadd.xlane.f32.xlu0 %v957
    %v959 = vpop.xlane.xlu0 %958
    %v960 = vadd.f32 %v914, %v915
    %961 = vadd.xlane.f32.xlu0 %v960
    %v962 = vpop.xlane.xlu0 %961
    %v963 = vadd.f32 %v916, %v917
    %964 = vadd.xlane.f32.xlu0 %v963
    %v965 = vpop.xlane.xlu0 %964
    %v966 = vld [vmem:[#allocation2] sm:$0x1]
    %968 = vset.pattern.permute.xlu0 0
    %969 = vperm.xlu0 %968, %v966
    %v970 = vpop.permute.xlu0 %969
    %v972 = vlaneseq
    %v973 = vshrl.u32 %v972, 7
    %v974 = vsub.s32 0, %v973
    %v975 = vrot.slane %v970, %v974
    %v976 = vadd.f32 %v920, %v975
    %v977 = vadd.f32 %v923, %v975
    %v978 = vadd.f32 %v926, %v975
    %v979 = vadd.f32 %v929, %v975
    %v980 = vadd.f32 %v932, %v975
    %v981 = vadd.f32 %v935, %v975
    %v982 = vadd.f32 %v938, %v975
    %v983 = vadd.f32 %v941, %v975
    %v984 = vadd.f32 %v944, %v975
    %v985 = vadd.f32 %v947, %v975
    %v986 = vadd.f32 %v950, %v975
    %v987 = vadd.f32 %v953, %v975
    %v988 = vadd.f32 %v956, %v975
    %v989 = vadd.f32 %v959, %v975
    %v990 = vadd.f32 %v962, %v975
    %v991 = vadd.f32 %v965, %v975
    %v1008 = vlaneseq
    %v1009 = vand.u32 %v1008, 127
    %v1010 = vlaneseq
    %v1011 = vshrl.u32 %v1010, 7
    %v1012 = vsub.s32 %v1009, %v1011
    %v1013 = vrot.slane %v976, %v1012
    %v1014 = vadd.s32 %v1009, 4294967288
    %v1015 = vlaneseq
    %v1016 = vshrl.u32 %v1015, 7
    %v1017 = vsub.s32 %v1014, %v1016
    %v1018 = vrot.slane %v977, %v1017
    %vm1019 = vcmask 130112
    %v1020 = vsel %vm1019, %v1018, %v1013
    %v1021 = vadd.s32 %v1009, 4294967280
    %v1022 = vlaneseq
    %v1023 = vshrl.u32 %v1022, 7
    %v1024 = vsub.s32 %v1021, %v1023
    %v1025 = vrot.slane %v978, %v1024
    %vm1026 = vcmask 195712
    %v1027 = vsel %vm1026, %v1025, %v1020
    %v1028 = vadd.s32 %v1009, 4294967272
    %v1029 = vlaneseq
    %v1030 = vshrl.u32 %v1029, 7
    %v1031 = vsub.s32 %v1028, %v1030
    %v1032 = vrot.slane %v979, %v1031
    %vm1033 = vcmask 261312
    %v1034 = vsel %vm1033, %v1032, %v1027
    %v1035 = vadd.s32 %v1009, 4294967264
    %v1036 = vlaneseq
    %v1037 = vshrl.u32 %v1036, 7
    %v1038 = vsub.s32 %v1035, %v1037
    %v1039 = vrot.slane %v980, %v1038
    %vm1040 = vcmask 326912
    %v1041 = vsel %vm1040, %v1039, %v1034
    %v1042 = vadd.s32 %v1009, 4294967256
    %v1043 = vlaneseq
    %v1044 = vshrl.u32 %v1043, 7
    %v1045 = vsub.s32 %v1042, %v1044
    %v1046 = vrot.slane %v981, %v1045
    %vm1047 = vcmask 392512
    %v1048 = vsel %vm1047, %v1046, %v1041
    %v1049 = vadd.s32 %v1009, 4294967248
    %v1050 = vlaneseq
    %v1051 = vshrl.u32 %v1050, 7
    %v1052 = vsub.s32 %v1049, %v1051
    %v1053 = vrot.slane %v982, %v1052
    %vm1054 = vcmask 458112
    %v1055 = vsel %vm1054, %v1053, %v1048
    %v1056 = vadd.s32 %v1009, 4294967240
    %v1057 = vlaneseq
    %v1058 = vshrl.u32 %v1057, 7
    %v1059 = vsub.s32 %v1056, %v1058
    %v1060 = vrot.slane %v983, %v1059
    %vm1061 = vcmask 523712
    %v1062 = vsel %vm1061, %v1060, %v1055
    %v1063 = vadd.s32 %v1009, 4294967232
    %v1064 = vlaneseq
    %v1065 = vshrl.u32 %v1064, 7
    %v1066 = vsub.s32 %v1063, %v1065
    %v1067 = vrot.slane %v984, %v1066
    %vm1068 = vcmask 589312
    %v1069 = vsel %vm1068, %v1067, %v1062
    %v1070 = vadd.s32 %v1009, 4294967224
    %v1071 = vlaneseq
    %v1072 = vshrl.u32 %v1071, 7
    %v1073 = vsub.s32 %v1070, %v1072
    %v1074 = vrot.slane %v985, %v1073
    %vm1075 = vcmask 654912
    %v1076 = vsel %vm1075, %v1074, %v1069
    %v1077 = vadd.s32 %v1009, 4294967216
    %v1078 = vlaneseq
    %v1079 = vshrl.u32 %v1078, 7
    %v1080 = vsub.s32 %v1077, %v1079
    %v1081 = vrot.slane %v986, %v1080
    %vm1082 = vcmask 720512
    %v1083 = vsel %vm1082, %v1081, %v1076
    %v1084 = vadd.s32 %v1009, 4294967208
    %v1085 = vlaneseq
    %v1086 = vshrl.u32 %v1085, 7
    %v1087 = vsub.s32 %v1084, %v1086
    %v1088 = vrot.slane %v987, %v1087
    %vm1089 = vcmask 786112
    %v1090 = vsel %vm1089, %v1088, %v1083
    %v1091 = vadd.s32 %v1009, 4294967200
    %v1092 = vlaneseq
    %v1093 = vshrl.u32 %v1092, 7
    %v1094 = vsub.s32 %v1091, %v1093
    %v1095 = vrot.slane %v988, %v1094
    %vm1096 = vcmask 851712
    %v1097 = vsel %vm1096, %v1095, %v1090
    %v1098 = vadd.s32 %v1009, 4294967192
    %v1099 = vlaneseq
    %v1100 = vshrl.u32 %v1099, 7
    %v1101 = vsub.s32 %v1098, %v1100
    %v1102 = vrot.slane %v989, %v1101
    %vm1103 = vcmask 917312
    %v1104 = vsel %vm1103, %v1102, %v1097
    %v1105 = vadd.s32 %v1009, 4294967184
    %v1106 = vlaneseq
    %v1107 = vshrl.u32 %v1106, 7
    %v1108 = vsub.s32 %v1105, %v1107
    %v1109 = vrot.slane %v990, %v1108
    %vm1110 = vcmask 982912
    %v1111 = vsel %vm1110, %v1109, %v1104
    %v1112 = vadd.s32 %v1009, 4294967176
    %v1113 = vlaneseq
    %v1114 = vshrl.u32 %v1113, 7
    %v1115 = vsub.s32 %v1112, %v1114
    %v1116 = vrot.slane %v991, %v1115
    %vm1117 = vcmask 1048512
    %v1118 = vsel %vm1117, %v1116, %v1111
    %1120 = vst [vmem:[%s9] sm:$0x1] %v1118
    // Predicated region
    $region46: #{actor_forward.1} parent=1 // pred_check
      _
    $region47: #{actor_forward.1} parent=1 // pred_check_branch
      %1122 = sbr.rel (0) target = $region49
    $region48: #{actor_forward.1} parent=1 // pred_region
      _
    $region49: #{actor_forward.1} parent=1 // pred_fallthru
      _
    // Predicated region
    $region50: #{actor_forward.1} parent=1 // pred_check
      _
    $region51: #{actor_forward.1} parent=1 // pred_check_branch
      %1124 = sbr.rel (0) target = $region53
    $region52: #{actor_forward.1} parent=1 // pred_region
      _
    $region53: #{actor_forward.1} parent=1 // pred_fallthru
      _
    %1125 = vsyncpa [#allocation4], 1
    %1126 = vsyncpa [#allocation6], 1

</llo_original>
